<compile_context>
chip_gen: v7x
topology: tpu7x:2x2x1
jax: 0.10.0
libtpu: 0.0.40
codegen_flags: <defaults>
</compile_context>

<pallas_src>
import jax
import jax.numpy as jnp
from jax.experimental import pallas as pl
from jax.experimental.pallas import tpu as pltpu


def _round_up(x, m):
    return ((x + m - 1) // m) * m


# ---------------------------------------------------------------------------
# Kernels
# ---------------------------------------------------------------------------
def _kernel_f32(x_ref, w_ref, b_ref, o_ref):
    """f32 output: accumulate directly into the resident output block."""
    k = pl.program_id(2)

    @pl.when(k == 0)
    def _():
        # Seed the accumulator with the bias (broadcast over rows).
        o_ref[...] = jnp.broadcast_to(b_ref[...], o_ref.shape).astype(o_ref.dtype)

    o_ref[...] += jnp.dot(
        x_ref[...], w_ref[...], preferred_element_type=jnp.float32
    )


def _kernel_acc(x_ref, w_ref, b_ref, o_ref, acc_ref):
    """Low-precision output: accumulate in f32 VMEM scratch, cast at the end."""
    k = pl.program_id(2)

    @pl.when(k == 0)
    def _():
        acc_ref[...] = jnp.broadcast_to(
            b_ref[...].astype(jnp.float32), acc_ref.shape
        )

    acc_ref[...] += jnp.dot(
        x_ref[...], w_ref[...], preferred_element_type=jnp.float32
    )

    @pl.when(k == pl.num_programs(2) - 1)
    def _():
        o_ref[...] = acc_ref[...].astype(o_ref.dtype)


# ---------------------------------------------------------------------------
# Device / budget helpers
# ---------------------------------------------------------------------------
def _device_kind():
    try:
        return jax.devices()[0].device_kind.lower()
    except Exception:
        return ""


def _is_v7():
    k = _device_kind()
    return ("v7" in k) or ("7x" in k)


def _vmem_limit_bytes():
    """Per-generation VMEM limit."""
    k = _device_kind()
    if _is_v7():
        return 48 * 1024 * 1024       # v7x: 64 MiB/TC physical, leave headroom
    if any(g in k for g in ("v4", "v5", "v6")):
        return 100 * 1024 * 1024      # 128 MiB-physical generations
    return 48 * 1024 * 1024           # unknown device: conservative


def _vmem_bytes(tm, tn, tk, x_item, w_item, out_item, need_acc, w_bufs):
    b = 2 * tm * tk * x_item          # x tile, double buffered
    b += w_bufs * tk * tn * w_item    # weight tile (1 buf when resident)
    b += 2 * tm * tn * out_item       # output tile, double buffered
    b += 2 * tn * 4                   # bias row
    if need_acc:
        b += tm * tn * 4              # f32 accumulator scratch
    return b


def _pick_tk(kp, tk_target):
    """Reduction tile: multiple of 128, <= tk_target, minimal K zero-padding."""
    tk_target = max(128, min(tk_target, kp))
    exact = 128
    for tk in range(tk_target, 127, -128):
        if kp % tk == 0:
            exact = tk
            break
    if exact >= 256:
        return exact
    # Accept a small K pad (<= kp/8) rather than a tiny reduction tile
    # (v5e: the accumulator read-modify-write cost per K step at tk=128).
    for tk in range(tk_target, 255, -128):
        if _round_up(kp, tk) - kp <= max(128, kp // 8):
            return tk
    return exact


def _shrink(tm, tn, tk, sub, fits):
    """Halve tiles (alignment preserved) until the VMEM budget is met.
    tk is floored at 256 before tn/tm reach their floors (v5e store slot)."""
    def dn(v, m):
        return max(m, (v // 2) // m * m)

    while not fits(tm, tn, tk):
        if tn > 512:
            tn = max(512, dn(tn, 128))
        elif tm > 512:
            tm = max(512, dn(tm, sub))
        elif tk > 256:
            tk = max(256, dn(tk, 128))
        elif tn > 128:
            tn = dn(tn, 128)
        elif tm > sub:
            tm = dn(tm, sub)
        elif tk > 128:
            tk = dn(tk, 128)
        else:
            break
    return tm, tn, tk


# ---------------------------------------------------------------------------
# Wrapper
# ---------------------------------------------------------------------------
def _linear(x, weight, bias, *, single_buffer_resident_weight):
    M, K = x.shape
    K2, N = weight.shape
    assert K == K2 and bias.shape == (N,)

    f32 = jnp.dtype(jnp.float32)
    bf16 = jnp.dtype(jnp.bfloat16)
    for name, a in (("x", x), ("weight", weight)):
        if jnp.dtype(a.dtype) not in (f32, bf16):
            raise ValueError(
                f"{name} dtype {a.dtype} not supported (float32/bfloat16 only)")

    out_dtype = jnp.result_type(x.dtype, weight.dtype)
    need_acc = jnp.dtype(out_dtype) != f32
    x_item = jnp.dtype(x.dtype).itemsize
    w_item = jnp.dtype(weight.dtype).itemsize
    out_item = jnp.dtype(out_dtype).itemsize

    # Sublane alignment for the (tm, *) tiles (x and output share tm).
    sub = 16 if (jnp.dtype(x.dtype) == bf16 or jnp.dtype(out_dtype) == bf16) else 8

    # Roofline-sized tile defaults (capped by dims and the VMEM budget below).
    if jnp.dtype(x.dtype) == bf16 and jnp.dtype(weight.dtype) == bf16:
        dtm, dtn, dtk = 1536, 1536, 512
    else:
        dtm, dtn, dtk = 1024, 1024, 512

    mp = _round_up(M, sub)        # tm cap only; x is NOT padded along M
    kp0 = _round_up(K, 128)
    np_ = _round_up(N, 128)

    vmem_limit = _vmem_limit_bytes()
    budget = int(vmem_limit * 0.85)

    def fits(tm, tn, tk, w_bufs=2):
        return _vmem_bytes(tm, tn, tk, x_item, w_item, out_item,
                           need_acc, w_bufs) <= budget

    tm = min(dtm, mp)
    tn = min(dtn, np_)
    w_bufs_resident = 1 if single_buffer_resident_weight else 2

    # ---- weight-resident configuration: whole (K, N) weight lives in VMEM --
    resident_tm = None
    for cand in (tm, 1024, 512, 256, 128, 64, 32, sub):
        cand = min(_round_up(min(cand, mp), sub), mp)
        if fits(cand, np_, kp0, w_bufs=w_bufs_resident):
            resident_tm = cand
            break

    if resident_tm is not None:
        weight_resident = True
        tm, tn, tk, kp = resident_tm, np_, kp0, kp0
        # Grow tm toward M with the leftover budget: fewer grid steps, fewer
        # bias-seed/output writes; the weight is fetched once regardless.
        while tm < mp:
            cand = min(mp, tm * 2)
            if fits(cand, tn, tk, w_bufs=w_bufs_resident):
                tm = cand
            else:
                break
    else:
        weight_resident = False
        tk = _pick_tk(kp0, min(dtk, kp0))
        tk0 = tk
        tm, tn, tk = _shrink(tm, tn, tk, sub, fits)
        if tk != tk0:                       # keep the minimal-K-pad property
            tk = _pick_tk(kp0, tk)
        kp = _round_up(kp0, tk)             # exact multiple of tk (pad <= small)

    # v7x megacore: keep at least 2 blocks on the parallel axes so both
    # TensorCores get work (v5e/v6e are single-TC, unaffected).
    if _is_v7() and pl.cdiv(M, tm) * pl.cdiv(np_, tn) < 2:
        if mp >= 2 * sub:
            tm = _round_up(pl.cdiv(mp, 2), sub)
        elif np_ >= 256:
            tn = _round_up(np_ // 2, 128)

    # Zero-pad only what is mandatory: K (reduction correctness) and N
    # (lane-dense weight/bias/output).  M tails are handled by Pallas's
    # masked partial-block writes - no x row pad, no output row slice.
    x_p = x if kp == K else jnp.pad(x, ((0, 0), (0, kp - K)))
    w_p = (weight if (kp, np_) == (K, N)
           else jnp.pad(weight, ((0, kp - K), (0, np_ - N))))
    b2d = (bias if np_ == N else jnp.pad(bias, (0, np_ - N))).reshape(1, np_)

    grid = (pl.cdiv(M, tm), pl.cdiv(np_, tn), kp // tk)

    x_spec = pl.BlockSpec((tm, tk), lambda i, j, k: (i, k))
    b_spec = pl.BlockSpec((1, tn), lambda i, j, k: (0, j))
    o_spec = pl.BlockSpec((tm, tn), lambda i, j, k: (i, j))
    if weight_resident and single_buffer_resident_weight:
        # Resident weight: block index constant per core -> single buffer.
        w_spec = pl.BlockSpec((tk, tn), lambda i, j, k: (k, j),
                              pipeline_mode=pl.Buffered(1))
    else:
        w_spec = pl.BlockSpec((tk, tn), lambda i, j, k: (k, j))

    kernel = _kernel_acc if need_acc else _kernel_f32
    scratch = [pltpu.VMEM((tm, tn), jnp.float32)] if need_acc else []

    cost = pl.CostEstimate(
        flops=2 * M * K * N,
        transcendentals=0,
        bytes_accessed=(M * K * x_item + kp * np_ * w_item
                        + np_ * jnp.dtype(bias.dtype).itemsize
                        + M * np_ * out_item),
    )

    out = pl.pallas_call(
        kernel,
        out_shape=jax.ShapeDtypeStruct((M, np_), out_dtype),
        grid_spec=pltpu.PrefetchScalarGridSpec(
            num_scalar_prefetch=0,
            grid=grid,
            in_specs=[x_spec, w_spec, b_spec],
            out_specs=o_spec,
            scratch_shapes=scratch,
        ),
        compiler_params=pltpu.CompilerParams(
            dimension_semantics=("parallel", "parallel", "arbitrary"),
            vmem_limit_bytes=vmem_limit,
        ),
        cost_estimate=cost,
    )(x_p, w_p, b2d)

    return out if np_ == N else out[:, :N]


def linear(x, weight, bias):
    """out = x @ weight + bias  with x:(M,K), weight:(K,N), bias:(N,)."""
    try:
        return _linear(x, weight, bias, single_buffer_resident_weight=True)
    except Exception:
        # pl.Buffered(1) on the resident weight may not be supported by this
        # jax/Mosaic version; retry with default double buffering (the weight
        # residency test then honestly counts two buffers).
        return _linear(x, weight, bias, single_buffer_resident_weight=False)


if __name__ == "__main__":
    # Deterministic parameters (mirrors the torch.randn shapes of the module).
    in_dim, out_dim = 32, 16
    batch = 8

    key = jax.random.PRNGKey(0)
    kx, kw, kb = jax.random.split(key, 3)
    x = jax.random.normal(kx, (batch, in_dim), dtype=jnp.float32)
    weight = jax.random.normal(kw, (in_dim, out_dim), dtype=jnp.float32)
    bias = jax.random.normal(kb, (out_dim,), dtype=jnp.float32)

    out = linear(x, weight, bias)
    out = jax.block_until_ready(out)

    # Correctness check against plain JAX reference.
    ref = x @ weight + bias
    assert out.shape == (batch, out_dim)
    assert jnp.allclose(out, ref, atol=1e-5, rtol=1e-5)

    print("KERNEL_OK")
</pallas_src>

<mosaic_0001>
module attributes {stable_mosaic.version = 11 : i64} {
  func.func @_kernel_f32(%arg0: i32, %arg1: i32, %arg2: i32, %arg3: memref<8x128xf32, #tpu.memory_space<vmem>>, %arg4: memref<128x128xf32, #tpu.memory_space<vmem>>, %arg5: memref<1x128xf32, #tpu.memory_space<vmem>>, %arg6: memref<8x128xf32, #tpu.memory_space<vmem>>) attributes {dimension_semantics = [#tpu.dimension_semantics<parallel>, #tpu.dimension_semantics<parallel>, #tpu.dimension_semantics<arbitrary>], iteration_bounds = array<i64: 1, 1, 1>, scalar_prefetch = 0 : i64, scratch_operands = 0 : i64, tpu.core_type = #tpu.core_type<tc>, window_params = [{transform_indices = @transform_0, window_bounds = array<i64: 8, 128>}, {pipeline_mode = #tpu.pipeline_mode<synchronous>, transform_indices = @transform_1, window_bounds = array<i64: 128, 128>}, {transform_indices = @transform_2, window_bounds = array<i64: 1, 128>}, {transform_indices = @transform_3, window_bounds = array<i64: 8, 128>}]} {
    %c0_i32 = arith.constant 0 : i32
    %0 = arith.cmpi eq, %arg2, %c0_i32 : i32
    %1 = arith.extui %0 : i1 to i32
    %c0_i32_0 = arith.constant 0 : i32
    %2 = arith.cmpi ne, %1, %c0_i32_0 : i32
    scf.if %2 {
      %c0_8 = arith.constant 0 : index
      %c0_9 = arith.constant 0 : index
      %9 = vector.load %arg5[%c0_8, %c0_9] : memref<1x128xf32, #tpu.memory_space<vmem>>, vector<1x128xf32>
      %10 = vector.shape_cast %9 : vector<1x128xf32> to vector<1x128xf32>
      %11 = vector.broadcast %10 : vector<1x128xf32> to vector<8x128xf32>
      %c0_10 = arith.constant 0 : index
      %c0_11 = arith.constant 0 : index
      %12 = vector.load %arg6[%c0_10, %c0_11] : memref<8x128xf32, #tpu.memory_space<vmem>>, vector<8x128xf32>
      tpu.vector_store %arg6[%c0_10, %c0_11], %11 {strides = array<i32>} : memref<8x128xf32, #tpu.memory_space<vmem>>, vector<8x128xf32>,
    } else {
    }
    %c0 = arith.constant 0 : index
    %c0_1 = arith.constant 0 : index
    %3 = vector.load %arg6[%c0, %c0_1] : memref<8x128xf32, #tpu.memory_space<vmem>>, vector<8x128xf32>
    %c0_2 = arith.constant 0 : index
    %c0_3 = arith.constant 0 : index
    %4 = vector.load %arg3[%c0_2, %c0_3] : memref<8x128xf32, #tpu.memory_space<vmem>>, vector<8x128xf32>
    %c0_4 = arith.constant 0 : index
    %c0_5 = arith.constant 0 : index
    %5 = vector.load %arg4[%c0_4, %c0_5] : memref<128x128xf32, #tpu.memory_space<vmem>>, vector<128x128xf32>
    %cst = arith.constant dense<0.000000e+00> : vector<8x128xf32>
    %6 = tpu.matmul %4, %5, %cst {dimension_numbers = #tpu.dot_dimension_numbers<[1], [0], [0], [1], [0, 0, 1, 1], [], []>} : vector<8x128xf32>, vector<128x128xf32>, vector<8x128xf32> -> vector<8x128xf32>
    %7 = arith.addf %3, %6 : vector<8x128xf32>
    %c0_6 = arith.constant 0 : index
    %c0_7 = arith.constant 0 : index
    %8 = vector.load %arg6[%c0_6, %c0_7] : memref<8x128xf32, #tpu.memory_space<vmem>>, vector<8x128xf32>
    tpu.vector_store %arg6[%c0_6, %c0_7], %7 {strides = array<i32>} : memref<8x128xf32, #tpu.memory_space<vmem>>, vector<8x128xf32>,
    return
  }
  func.func @transform_0(%arg0: i32, %arg1: i32, %arg2: i32) -> (i32, i32) {
    %c0_i32 = arith.constant 0 : i32
    return %arg0, %arg2 : i32, i32
  }
  func.func @transform_1(%arg0: i32, %arg1: i32, %arg2: i32) -> (i32, i32) {
    %c0_i32 = arith.constant 0 : i32
    return %arg2, %arg1 : i32, i32
  }
  func.func @transform_2(%arg0: i32, %arg1: i32, %arg2: i32) -> (i32, i32) {
    %c0_i32 = arith.constant 0 : i32
    %c0_i32_0 = arith.constant 0 : i32
    return %c0_i32, %arg1 : i32, i32
  }
  func.func @transform_3(%arg0: i32, %arg1: i32, %arg2: i32) -> (i32, i32) {
    %c0_i32 = arith.constant 0 : i32
    return %arg0, %arg1 : i32, i32
  }
}

module attributes {stable_mosaic.version = 11 : i64} {
  func.func @_kernel_f32(%arg0: i32, %arg1: i32, %arg2: i32, %arg3: memref<8x128xf32, #tpu.memory_space<vmem>>, %arg4: memref<128x128xf32, #tpu.memory_space<vmem>>, %arg5: memref<1x128xf32, #tpu.memory_space<vmem>>, %arg6: memref<8x128xf32, #tpu.memory_space<vmem>>) attributes {dimension_semantics = [#tpu.dimension_semantics<parallel>, #tpu.dimension_semantics<parallel>, #tpu.dimension_semantics<arbitrary>], iteration_bounds = array<i64: 1, 1, 1>, scalar_prefetch = 0 : i64, scratch_operands = 0 : i64, tpu.core_type = #tpu.core_type<tc>, window_params = [{transform_indices = @transform_0, window_bounds = array<i64: 8, 128>}, {transform_indices = @transform_1, window_bounds = array<i64: 128, 128>}, {transform_indices = @transform_2, window_bounds = array<i64: 1, 128>}, {transform_indices = @transform_3, window_bounds = array<i64: 8, 128>}]} {
    %c0_i32 = arith.constant 0 : i32
    %0 = arith.cmpi eq, %arg2, %c0_i32 : i32
    %1 = arith.extui %0 : i1 to i32
    %c0_i32_0 = arith.constant 0 : i32
    %2 = arith.cmpi ne, %1, %c0_i32_0 : i32
    scf.if %2 {
      %c0_8 = arith.constant 0 : index
      %c0_9 = arith.constant 0 : index
      %9 = vector.load %arg5[%c0_8, %c0_9] : memref<1x128xf32, #tpu.memory_space<vmem>>, vector<1x128xf32>
      %10 = vector.shape_cast %9 : vector<1x128xf32> to vector<1x128xf32>
      %11 = vector.broadcast %10 : vector<1x128xf32> to vector<8x128xf32>
      %c0_10 = arith.constant 0 : index
      %c0_11 = arith.constant 0 : index
      %12 = vector.load %arg6[%c0_10, %c0_11] : memref<8x128xf32, #tpu.memory_space<vmem>>, vector<8x128xf32>
      tpu.vector_store %arg6[%c0_10, %c0_11], %11 {strides = array<i32>} : memref<8x128xf32, #tpu.memory_space<vmem>>, vector<8x128xf32>,
    } else {
    }
    %c0 = arith.constant 0 : index
    %c0_1 = arith.constant 0 : index
    %3 = vector.load %arg6[%c0, %c0_1] : memref<8x128xf32, #tpu.memory_space<vmem>>, vector<8x128xf32>
    %c0_2 = arith.constant 0 : index
    %c0_3 = arith.constant 0 : index
    %4 = vector.load %arg3[%c0_2, %c0_3] : memref<8x128xf32, #tpu.memory_space<vmem>>, vector<8x128xf32>
    %c0_4 = arith.constant 0 : index
    %c0_5 = arith.constant 0 : index
    %5 = vector.load %arg4[%c0_4, %c0_5] : memref<128x128xf32, #tpu.memory_space<vmem>>, vector<128x128xf32>
    %cst = arith.constant dense<0.000000e+00> : vector<8x128xf32>
    %6 = tpu.matmul %4, %5, %cst {dimension_numbers = #tpu.dot_dimension_numbers<[1], [0], [0], [1], [0, 0, 1, 1], [], []>} : vector<8x128xf32>, vector<128x128xf32>, vector<8x128xf32> -> vector<8x128xf32>
    %7 = arith.addf %3, %6 : vector<8x128xf32>
    %c0_6 = arith.constant 0 : index
    %c0_7 = arith.constant 0 : index
    %8 = vector.load %arg6[%c0_6, %c0_7] : memref<8x128xf32, #tpu.memory_space<vmem>>, vector<8x128xf32>
    tpu.vector_store %arg6[%c0_6, %c0_7], %7 {strides = array<i32>} : memref<8x128xf32, #tpu.memory_space<vmem>>, vector<8x128xf32>,
    return
  }
  func.func @transform_0(%arg0: i32, %arg1: i32, %arg2: i32) -> (i32, i32) {
    %c0_i32 = arith.constant 0 : i32
    return %arg0, %arg2 : i32, i32
  }
  func.func @transform_1(%arg0: i32, %arg1: i32, %arg2: i32) -> (i32, i32) {
    %c0_i32 = arith.constant 0 : i32
    return %arg2, %arg1 : i32, i32
  }
  func.func @transform_2(%arg0: i32, %arg1: i32, %arg2: i32) -> (i32, i32) {
    %c0_i32 = arith.constant 0 : i32
    %c0_i32_0 = arith.constant 0 : i32
    return %c0_i32, %arg1 : i32, i32
  }
  func.func @transform_3(%arg0: i32, %arg1: i32, %arg2: i32) -> (i32, i32) {
    %c0_i32 = arith.constant 0 : i32
    return %arg0, %arg1 : i32, i32
  }
}

</mosaic_0001>

<llo_original>
// kernel: tpu_custom_call.1
$region0: #{tpu_custom_call.1}
  #allocation0 [shape = 'u32[]', space=smem, size = 0x4, offset = 0x4, fixed_abs, tag = 'smem constant byte address 0x4 - core index']
  #allocation1 [shape = 'u32[144,128]{1,0:T(1,128)}', space=vmem, size = 0x12000, scoped, tag = 'internal scratch']
  %s0 = inlined_call_operand.hbm [shape: f32[8,128], index: 0, kind: input, shape index: {}]
  %s1 = inlined_call_operand.hbm [shape: f32[128,128], index: 1, kind: input, shape index: {}]
  %s2 = inlined_call_operand.vmem [shape: f32[1,128], index: 2, kind: input, shape index: {}]
  %s3 = inlined_call_operand.hbm [shape: f32[8,128], index: 3, kind: output, shape index: {}]
  %s4 = sld [smem:[#allocation0]]
  $region34: #{tpu_custom_call.1} parent=0
    _
  %s6 = ssub.s32 1, %s4
  %s7 = scalar_select 0, %s6, %s4
  $region1: #{tpu_custom_call.1} parent=0
    #allocation2 [shape = 'u8[4096]{0}', space=vmem, size = 0x1000, scoped, tag = 'input window, operand 0, single buffered']
    #allocation3 [shape = 's32[1]{0}', space=sflag, size = 0x4, scoped, tag = 'scoped memory for tpu_custom_call.1']
    #allocation4 [shape = 's32[1]{0}', space=sflag, size = 0x4, scoped, tag = 'scoped memory for tpu_custom_call.1']
    #allocation5 [shape = 'u8[65536]{0}', space=vmem, size = 0x10000, scoped, tag = 'input window, operand 1, single buffered']
    #allocation6 [shape = 's32[1]{0}', space=sflag, size = 0x4, scoped, tag = 'scoped memory for tpu_custom_call.1']
    #allocation7 [shape = 'u8[4096]{0}', space=vmem, size = 0x1000, scoped, tag = 'output window, operand 0, single buffered']
    %8 = vsyncpa [#allocation3], 0
    %9 = vsyncpa [#allocation6], 0
    %10 = vsyncpa [#allocation4], 0
    // Predicated region
    $region2: #{tpu_custom_call.1} parent=1 // pred_check
      _
    $region3: #{tpu_custom_call.1} parent=1 // pred_check_branch
      %12 = sbr.rel (0) target = $region5
    $region4: #{tpu_custom_call.1} parent=1 // pred_region
      %s14 = ssub.s32 128, 128
      %15 = vsyncadd [#allocation3], %s14
      %s17 = sshll.u32 [#allocation2], 4
      %s18 = int_to_ptr.vmem [resolvable:$true] %s17
      %20 = dma.hbm_to_vmem [thread:$0]  %s0, 128, %s18, [#allocation3]
    $region5: #{tpu_custom_call.1} parent=1 // pred_fallthru
      _
    // Predicated region
    $region6: #{tpu_custom_call.1} parent=1 // pred_check
      _
    $region7: #{tpu_custom_call.1} parent=1 // pred_check_branch
      %22 = sbr.rel (0) target = $region9
    $region8: #{tpu_custom_call.1} parent=1 // pred_region
      %s24 = ssub.s32 2048, 2048
      %25 = vsyncadd [#allocation6], %s24
      %s26 = sshll.u32 [#allocation5], 4
      %s27 = int_to_ptr.vmem [resolvable:$true] %s26
      %32 = dma.hbm_to_vmem [thread:$0]  %s1, 2048, %s27, [#allocation6], 128, 128, 8
    $region9: #{tpu_custom_call.1} parent=1 // pred_fallthru
      _
    // Predicated region
    $region10: #{tpu_custom_call.1} parent=1 // pred_check
      _
    $region11: #{tpu_custom_call.1} parent=1 // pred_check_branch
      %34 = sbr.rel (0) target = $region13
    $region12: #{tpu_custom_call.1} parent=1 // pred_region
      _
    $region13: #{tpu_custom_call.1} parent=1 // pred_fallthru
      _
    // Predicated region
    $region14: #{tpu_custom_call.1} parent=1 // pred_check
      _
    $region15: #{tpu_custom_call.1} parent=1 // pred_check_branch
      %36 = sbr.rel (0) target = $region17
    $region16: #{tpu_custom_call.1} parent=1 // pred_region
      %37 = dma.done [#allocation3], 128
    $region17: #{tpu_custom_call.1} parent=1 // pred_fallthru
      _
    // Predicated region
    $region18: #{tpu_custom_call.1} parent=1 // pred_check
      _
    $region19: #{tpu_custom_call.1} parent=1 // pred_check_branch
      %39 = sbr.rel (0) target = $region21
    $region20: #{tpu_custom_call.1} parent=1 // pred_region
      %40 = dma.done [#allocation6], 2048
    $region21: #{tpu_custom_call.1} parent=1 // pred_fallthru
      _
    %p41 = scmp.eq.s32.totalorder 0, 0
    // Predicated region
    $region22: #{tpu_custom_call.1} parent=1 // pred_check
      %p42 = pneg %p41
    $region23: #{tpu_custom_call.1} parent=1 // pred_check_branch
      %44 = sbr.rel (%p42) target = $region25
    $region24: #{tpu_custom_call.1} parent=1 // pred_region
      %v45 = vld [vmem:[%s2] sm:$0x1]
      %v47 = vlaneseq
      %v48 = vshrl.u32 %v47, 7
      %v49 = vsub.s32 0, %v48
      %v50 = vrot.slane %v45, %v49
      %52 = vst [vmem:[#allocation7] sm:$0xff] %v50
    $region25: #{tpu_custom_call.1} parent=1 // pred_fallthru
      _
    %v53 = vld [vmem:[#allocation7] sm:$0xff]
    %v54 = vld [vmem:[#allocation2] sm:$0xff]
    %v55 = vld [vmem:[#allocation5] sm:$0xff]
    %v56 = vld [vmem:[#allocation5 + $0x8] sm:$0xff]
    %v57 = vld [vmem:[#allocation5 + $0x10] sm:$0xff]
    %v58 = vld [vmem:[#allocation5 + $0x18] sm:$0xff]
    %v59 = vld [vmem:[#allocation5 + $0x20] sm:$0xff]
    %v60 = vld [vmem:[#allocation5 + $0x28] sm:$0xff]
    %v61 = vld [vmem:[#allocation5 + $0x30] sm:$0xff]
    %v62 = vld [vmem:[#allocation5 + $0x38] sm:$0xff]
    %v63 = vld [vmem:[#allocation5 + $0x40] sm:$0xff]
    %v64 = vld [vmem:[#allocation5 + $0x48] sm:$0xff]
    %v65 = vld [vmem:[#allocation5 + $0x50] sm:$0xff]
    %v66 = vld [vmem:[#allocation5 + $0x58] sm:$0xff]
    %v67 = vld [vmem:[#allocation5 + $0x60] sm:$0xff]
    %v68 = vld [vmem:[#allocation5 + $0x68] sm:$0xff]
    %v69 = vld [vmem:[#allocation5 + $0x70] sm:$0xff]
    %v70 = vld [vmem:[#allocation5 + $0x78] sm:$0xff]
    %71 = vmatprep.subr.mxu0 0.0
    %72 = vmatpush1.msra.mxu0 %v55
    %73 = vmatprep.subr.mxu0 0.0
    %74 = vmatpush1.msra.mxu0 %v56
    %75 = vmatprep.subr.mxu0 0.0
    %76 = vmatpush1.msra.mxu0 %v57
    %77 = vmatprep.subr.mxu0 0.0
    %78 = vmatpush1.msra.mxu0 %v58
    %79 = vmatprep.subr.mxu0 0.0
    %80 = vmatpush1.msra.mxu0 %v59
    %81 = vmatprep.subr.mxu0 0.0
    %82 = vmatpush1.msra.mxu0 %v60
    %83 = vmatprep.subr.mxu0 0.0
    %84 = vmatpush1.msra.mxu0 %v61
    %85 = vmatprep.subr.mxu0 0.0
    %86 = vmatpush1.msra.mxu0 %v62
    %87 = vmatprep.subr.mxu0 0.0
    %88 = vmatpush1.msra.mxu0 %v63
    %89 = vmatprep.subr.mxu0 0.0
    %90 = vmatpush1.msra.mxu0 %v64
    %91 = vmatprep.subr.mxu0 0.0
    %92 = vmatpush1.msra.mxu0 %v65
    %93 = vmatprep.subr.mxu0 0.0
    %94 = vmatpush1.msra.mxu0 %v66
    %95 = vmatprep.subr.mxu0 0.0
    %96 = vmatpush1.msra.mxu0 %v67
    %97 = vmatprep.subr.mxu0 0.0
    %98 = vmatpush1.msra.mxu0 %v68
    %99 = vmatprep.subr.mxu0 0.0
    %100 = vmatpush1.msra.mxu0 %v69
    %101 = vmatprep.subr.mxu0 0.0
    %102 = vmatpush1.msra.mxu0 %v70
    %103 = vmatprep.subr.mxu0 0.0
    %104 = vmatpush1.msra.mxu0 0.0
    %105 = vmatprep.subr.mxu0 0.0
    %106 = vmatpush1.msra.mxu0 0.0
    %107 = vmatprep.subr.mxu0 0.0
    %108 = vmatpush1.msra.mxu0 0.0
    %109 = vmatprep.subr.mxu0 0.0
    %110 = vmatpush1.msra.mxu0 0.0
    %111 = vmatprep.subr.mxu0 0.0
    %112 = vmatpush1.msra.mxu0 0.0
    %113 = vmatprep.subr.mxu0 0.0
    %114 = vmatpush1.msra.mxu0 0.0
    %115 = vmatprep.subr.mxu0 0.0
    %116 = vmatpush1.msra.mxu0 0.0
    %117 = vmatprep.subr.mxu0 0.0
    %118 = vmatpush1.msra.mxu0 0.0
    %119 = vmatprep.subr.mxu0 0.0
    %120 = vmatpush1.msra.mxu0 0.0
    %121 = vmatprep.subr.mxu0 0.0
    %122 = vmatpush1.msra.mxu0 0.0
    %123 = vmatprep.subr.mxu0 0.0
    %124 = vmatpush1.msra.mxu0 0.0
    %125 = vmatprep.subr.mxu0 0.0
    %126 = vmatpush1.msra.mxu0 0.0
    %127 = vmatprep.subr.mxu0 0.0
    %128 = vmatpush1.msra.mxu0 0.0
    %129 = vmatprep.subr.mxu0 0.0
    %130 = vmatpush1.msra.mxu0 0.0
    %131 = vmatprep.subr.mxu0 0.0
    %132 = vmatpush1.msra.mxu0 0.0
    %133 = vmatprep.subr.mxu0 0.0
    %134 = vmatpush1.msra.mxu0 0.0
    %135 = vmatprep.mubr.f32.mxu0 0.0
    %136 = vmatmul.mubr.f32.gmra.mrb[0].mxu0 %v54
    %v137 = vpop.f32.mrb[0].mxu0
    %v138 = vadd.f32 0.0, %v137
    %v139 = vpop.f32.mrb[0].mxu0
    %140 = vdwg.mxu0
    %v141 = vadd.f32 %v53, %v138
    %142 = vst [vmem:[#allocation7] sm:$0xff] %v141
    // Predicated region
    $region26: #{tpu_custom_call.1} parent=1 // pred_check
      _
    $region27: #{tpu_custom_call.1} parent=1 // pred_check_branch
      %144 = sbr.rel (0) target = $region29
    $region28: #{tpu_custom_call.1} parent=1 // pred_region
      %s146 = ssub.s32 128, 128
      %147 = vsyncadd [#allocation4], %s146
      %s149 = sshll.u32 [#allocation7], 4
      %s150 = int_to_ptr.vmem [resolvable:$true] %s149
      %152 = dma.vmem_to_hbm [thread:$0]  %s150, 128, %s3, [#allocation4]
    $region29: #{tpu_custom_call.1} parent=1 // pred_fallthru
      _
    // Predicated region
    $region30: #{tpu_custom_call.1} parent=1 // pred_check
      _
    $region31: #{tpu_custom_call.1} parent=1 // pred_check_branch
      %154 = sbr.rel (0) target = $region33
    $region32: #{tpu_custom_call.1} parent=1 // pred_region
      %155 = dma.done [#allocation4], 128
    $region33: #{tpu_custom_call.1} parent=1 // pred_fallthru
      _
    %156 = vsyncpa [#allocation3], 1
    %157 = vsyncpa [#allocation6], 1
    %158 = vsyncpa [#allocation4], 1

// kernel: tpu_custom_call.1
$region0: #{tpu_custom_call.1}
  #allocation0 [shape = 'u32[]', space=smem, size = 0x4, offset = 0x4, fixed_abs, tag = 'smem constant byte address 0x4 - core index']
  #allocation1 [shape = 'u32[144,128]{1,0:T(1,128)}', space=vmem, size = 0x12000, scoped, tag = 'internal scratch']
  %s0 = inlined_call_operand.hbm [shape: f32[8,128], index: 0, kind: input, shape index: {}]
  %s1 = inlined_call_operand.hbm [shape: f32[128,128], index: 1, kind: input, shape index: {}]
  %s2 = inlined_call_operand.vmem [shape: f32[1,128], index: 2, kind: input, shape index: {}]
  %s3 = inlined_call_operand.hbm [shape: f32[8,128], index: 3, kind: output, shape index: {}]
  %s4 = sld [smem:[#allocation0]]
  $region34: #{tpu_custom_call.1} parent=0
    _
  %s6 = ssub.s32 1, %s4
  %s7 = scalar_select 0, %s6, %s4
  $region1: #{tpu_custom_call.1} parent=0
    #allocation2 [shape = 'u8[4096]{0}', space=vmem, size = 0x1000, scoped, tag = 'input window, operand 0, single buffered']
    #allocation3 [shape = 's32[1]{0}', space=sflag, size = 0x4, scoped, tag = 'scoped memory for tpu_custom_call.1']
    #allocation4 [shape = 's32[1]{0}', space=sflag, size = 0x4, scoped, tag = 'scoped memory for tpu_custom_call.1']
    #allocation5 [shape = 'u8[65536]{0}', space=vmem, size = 0x10000, scoped, tag = 'input window, operand 1, single buffered']
    #allocation6 [shape = 's32[1]{0}', space=sflag, size = 0x4, scoped, tag = 'scoped memory for tpu_custom_call.1']
    #allocation7 [shape = 'u8[4096]{0}', space=vmem, size = 0x1000, scoped, tag = 'output window, operand 0, single buffered']
    %8 = vsyncpa [#allocation3], 0
    %9 = vsyncpa [#allocation6], 0
    %10 = vsyncpa [#allocation4], 0
    // Predicated region
    $region2: #{tpu_custom_call.1} parent=1 // pred_check
      _
    $region3: #{tpu_custom_call.1} parent=1 // pred_check_branch
      %12 = sbr.rel (0) target = $region5
    $region4: #{tpu_custom_call.1} parent=1 // pred_region
      %s14 = ssub.s32 128, 128
      %15 = vsyncadd [#allocation3], %s14
      %s17 = sshll.u32 [#allocation2], 4
      %s18 = int_to_ptr.vmem [resolvable:$true] %s17
      %20 = dma.hbm_to_vmem [thread:$0]  %s0, 128, %s18, [#allocation3]
    $region5: #{tpu_custom_call.1} parent=1 // pred_fallthru
      _
    // Predicated region
    $region6: #{tpu_custom_call.1} parent=1 // pred_check
      _
    $region7: #{tpu_custom_call.1} parent=1 // pred_check_branch
      %22 = sbr.rel (0) target = $region9
    $region8: #{tpu_custom_call.1} parent=1 // pred_region
      %s24 = ssub.s32 2048, 2048
      %25 = vsyncadd [#allocation6], %s24
      %s26 = sshll.u32 [#allocation5], 4
      %s27 = int_to_ptr.vmem [resolvable:$true] %s26
      %32 = dma.hbm_to_vmem [thread:$0]  %s1, 2048, %s27, [#allocation6], 128, 128, 8
    $region9: #{tpu_custom_call.1} parent=1 // pred_fallthru
      _
    // Predicated region
    $region10: #{tpu_custom_call.1} parent=1 // pred_check
      _
    $region11: #{tpu_custom_call.1} parent=1 // pred_check_branch
      %34 = sbr.rel (0) target = $region13
    $region12: #{tpu_custom_call.1} parent=1 // pred_region
      _
    $region13: #{tpu_custom_call.1} parent=1 // pred_fallthru
      _
    // Predicated region
    $region14: #{tpu_custom_call.1} parent=1 // pred_check
      _
    $region15: #{tpu_custom_call.1} parent=1 // pred_check_branch
      %36 = sbr.rel (0) target = $region17
    $region16: #{tpu_custom_call.1} parent=1 // pred_region
      %37 = dma.done [#allocation3], 128
    $region17: #{tpu_custom_call.1} parent=1 // pred_fallthru
      _
    // Predicated region
    $region18: #{tpu_custom_call.1} parent=1 // pred_check
      _
    $region19: #{tpu_custom_call.1} parent=1 // pred_check_branch
      %39 = sbr.rel (0) target = $region21
    $region20: #{tpu_custom_call.1} parent=1 // pred_region
      %40 = dma.done [#allocation6], 2048
    $region21: #{tpu_custom_call.1} parent=1 // pred_fallthru
      _
    %p41 = scmp.eq.s32.totalorder 0, 0
    // Predicated region
    $region22: #{tpu_custom_call.1} parent=1 // pred_check
      %p42 = pneg %p41
    $region23: #{tpu_custom_call.1} parent=1 // pred_check_branch
      %44 = sbr.rel (%p42) target = $region25
    $region24: #{tpu_custom_call.1} parent=1 // pred_region
      %v45 = vld [vmem:[%s2] sm:$0x1]
      %v47 = vlaneseq
      %v48 = vshrl.u32 %v47, 7
      %v49 = vsub.s32 0, %v48
      %v50 = vrot.slane %v45, %v49
      %52 = vst [vmem:[#allocation7] sm:$0xff] %v50
    $region25: #{tpu_custom_call.1} parent=1 // pred_fallthru
      _
    %v53 = vld [vmem:[#allocation7] sm:$0xff]
    %v54 = vld [vmem:[#allocation2] sm:$0xff]
    %v55 = vld [vmem:[#allocation5] sm:$0xff]
    %v56 = vld [vmem:[#allocation5 + $0x8] sm:$0xff]
    %v57 = vld [vmem:[#allocation5 + $0x10] sm:$0xff]
    %v58 = vld [vmem:[#allocation5 + $0x18] sm:$0xff]
    %v59 = vld [vmem:[#allocation5 + $0x20] sm:$0xff]
    %v60 = vld [vmem:[#allocation5 + $0x28] sm:$0xff]
    %v61 = vld [vmem:[#allocation5 + $0x30] sm:$0xff]
    %v62 = vld [vmem:[#allocation5 + $0x38] sm:$0xff]
    %v63 = vld [vmem:[#allocation5 + $0x40] sm:$0xff]
    %v64 = vld [vmem:[#allocation5 + $0x48] sm:$0xff]
    %v65 = vld [vmem:[#allocation5 + $0x50] sm:$0xff]
    %v66 = vld [vmem:[#allocation5 + $0x58] sm:$0xff]
    %v67 = vld [vmem:[#allocation5 + $0x60] sm:$0xff]
    %v68 = vld [vmem:[#allocation5 + $0x68] sm:$0xff]
    %v69 = vld [vmem:[#allocation5 + $0x70] sm:$0xff]
    %v70 = vld [vmem:[#allocation5 + $0x78] sm:$0xff]
    %71 = vmatprep.subr.mxu0 0.0
    %72 = vmatpush1.msra.mxu0 %v55
    %73 = vmatprep.subr.mxu0 0.0
    %74 = vmatpush1.msra.mxu0 %v56
    %75 = vmatprep.subr.mxu0 0.0
    %76 = vmatpush1.msra.mxu0 %v57
    %77 = vmatprep.subr.mxu0 0.0
    %78 = vmatpush1.msra.mxu0 %v58
    %79 = vmatprep.subr.mxu0 0.0
    %80 = vmatpush1.msra.mxu0 %v59
    %81 = vmatprep.subr.mxu0 0.0
    %82 = vmatpush1.msra.mxu0 %v60
    %83 = vmatprep.subr.mxu0 0.0
    %84 = vmatpush1.msra.mxu0 %v61
    %85 = vmatprep.subr.mxu0 0.0
    %86 = vmatpush1.msra.mxu0 %v62
    %87 = vmatprep.subr.mxu0 0.0
    %88 = vmatpush1.msra.mxu0 %v63
    %89 = vmatprep.subr.mxu0 0.0
    %90 = vmatpush1.msra.mxu0 %v64
    %91 = vmatprep.subr.mxu0 0.0
    %92 = vmatpush1.msra.mxu0 %v65
    %93 = vmatprep.subr.mxu0 0.0
    %94 = vmatpush1.msra.mxu0 %v66
    %95 = vmatprep.subr.mxu0 0.0
    %96 = vmatpush1.msra.mxu0 %v67
    %97 = vmatprep.subr.mxu0 0.0
    %98 = vmatpush1.msra.mxu0 %v68
    %99 = vmatprep.subr.mxu0 0.0
    %100 = vmatpush1.msra.mxu0 %v69
    %101 = vmatprep.subr.mxu0 0.0
    %102 = vmatpush1.msra.mxu0 %v70
    %103 = vmatprep.subr.mxu0 0.0
    %104 = vmatpush1.msra.mxu0 0.0
    %105 = vmatprep.subr.mxu0 0.0
    %106 = vmatpush1.msra.mxu0 0.0
    %107 = vmatprep.subr.mxu0 0.0
    %108 = vmatpush1.msra.mxu0 0.0
    %109 = vmatprep.subr.mxu0 0.0
    %110 = vmatpush1.msra.mxu0 0.0
    %111 = vmatprep.subr.mxu0 0.0
    %112 = vmatpush1.msra.mxu0 0.0
    %113 = vmatprep.subr.mxu0 0.0
    %114 = vmatpush1.msra.mxu0 0.0
    %115 = vmatprep.subr.mxu0 0.0
    %116 = vmatpush1.msra.mxu0 0.0
    %117 = vmatprep.subr.mxu0 0.0
    %118 = vmatpush1.msra.mxu0 0.0
    %119 = vmatprep.subr.mxu0 0.0
    %120 = vmatpush1.msra.mxu0 0.0
    %121 = vmatprep.subr.mxu0 0.0
    %122 = vmatpush1.msra.mxu0 0.0
    %123 = vmatprep.subr.mxu0 0.0
    %124 = vmatpush1.msra.mxu0 0.0
    %125 = vmatprep.subr.mxu0 0.0
    %126 = vmatpush1.msra.mxu0 0.0
    %127 = vmatprep.subr.mxu0 0.0
    %128 = vmatpush1.msra.mxu0 0.0
    %129 = vmatprep.subr.mxu0 0.0
    %130 = vmatpush1.msra.mxu0 0.0
    %131 = vmatprep.subr.mxu0 0.0
    %132 = vmatpush1.msra.mxu0 0.0
    %133 = vmatprep.subr.mxu0 0.0
    %134 = vmatpush1.msra.mxu0 0.0
    %135 = vmatprep.mubr.f32.mxu0 0.0
    %136 = vmatmul.mubr.f32.gmra.mrb[0].mxu0 %v54
    %v137 = vpop.f32.mrb[0].mxu0
    %v138 = vadd.f32 0.0, %v137
    %v139 = vpop.f32.mrb[0].mxu0
    %140 = vdwg.mxu0
    %v141 = vadd.f32 %v53, %v138
    %142 = vst [vmem:[#allocation7] sm:$0xff] %v141
    // Predicated region
    $region26: #{tpu_custom_call.1} parent=1 // pred_check
      _
    $region27: #{tpu_custom_call.1} parent=1 // pred_check_branch
      %144 = sbr.rel (0) target = $region29
    $region28: #{tpu_custom_call.1} parent=1 // pred_region
      %s146 = ssub.s32 128, 128
      %147 = vsyncadd [#allocation4], %s146
      %s149 = sshll.u32 [#allocation7], 4
      %s150 = int_to_ptr.vmem [resolvable:$true] %s149
      %152 = dma.vmem_to_hbm [thread:$0]  %s150, 128, %s3, [#allocation4]
    $region29: #{tpu_custom_call.1} parent=1 // pred_fallthru
      _
    // Predicated region
    $region30: #{tpu_custom_call.1} parent=1 // pred_check
      _
    $region31: #{tpu_custom_call.1} parent=1 // pred_check_branch
      %154 = sbr.rel (0) target = $region33
    $region32: #{tpu_custom_call.1} parent=1 // pred_region
      %155 = dma.done [#allocation4], 128
    $region33: #{tpu_custom_call.1} parent=1 // pred_fallthru
      _
    %156 = vsyncpa [#allocation3], 1
    %157 = vsyncpa [#allocation6], 1
    %158 = vsyncpa [#allocation4], 1

</llo_original>
